<compile_context>
chip_gen: v7x
topology: tpu7x:2x2x1
jax: 0.10.0
libtpu: 0.0.40
codegen_flags: <defaults>
</compile_context>

<pallas_src>
import jax
import jax.numpy as jnp
from jax.experimental import pallas as pl
from jax.experimental.pallas import tpu as pltpu


_LRELU_SLOPE = 0.2
_LANE = 128
_SUBLANE = 8


def _round_up(n, m):
    return (n + m - 1) // m * m


def _lrelu(h):
    # LeakyReLU(0.2) in f32 on the VPU.
    return jnp.where(h >= 0, h, _LRELU_SLOPE * h)


def critic_kernel(x_ref, att_ref,
                  w1x_ref, w1a_ref, b1_ref,
                  w2_ref, b2_ref,
                  w3_ref, b3_ref,
                  w4_ref, b4_ref,
                  o_ref):
    """One batch tile: fused concat + 4 Linear layers + LeakyReLU(0.2)."""
    cdt = w1x_ref.dtype  # matmul-operand dtype (f32 or bf16); accumulate in f32

    # fc1 with the concat fused: cat([x, att]) @ W1 == x @ W1[:res] + att @ W1[res:]
    h = jnp.dot(x_ref[...].astype(cdt), w1x_ref[...],
                preferred_element_type=jnp.float32)
    h = h + jnp.dot(att_ref[...].astype(cdt), w1a_ref[...],
                    preferred_element_type=jnp.float32)
    h = _lrelu(h + b1_ref[...])

    # fc2, fc3
    h = _lrelu(jnp.dot(h.astype(cdt), w2_ref[...],
                       preferred_element_type=jnp.float32) + b2_ref[...])
    h = _lrelu(jnp.dot(h.astype(cdt), w3_ref[...],
                       preferred_element_type=jnp.float32) + b3_ref[...])

    # fc4 (output padded to 128 lanes; only column 0 is meaningful)
    out = jnp.dot(h.astype(cdt), w4_ref[...],
                  preferred_element_type=jnp.float32) + b4_ref[...]
    o_ref[...] = out.astype(o_ref.dtype)


def init_params(key, res_size, att_size, ndh):
    """Logical (PyTorch-equivalent) params: W is (in, out), bias is (out,).

    Mirrors weights_init: Linear weights ~ N(0, 0.02), biases = 0.
    """
    in_dim = res_size + att_size
    k1, k2, k3, k4 = jax.random.split(key, 4)

    def linear(k, fan_in, fan_out):
        w = 0.02 * jax.random.normal(k, (fan_in, fan_out), dtype=jnp.float32)
        b = jnp.zeros((fan_out,), dtype=jnp.float32)
        return w, b

    w1, b1 = linear(k1, in_dim, ndh)
    w2, b2 = linear(k2, ndh, ndh)
    w3, b3 = linear(k3, ndh, ndh)
    w4, b4 = linear(k4, ndh, 1)
    return (w1, b1, w2, b2, w3, b3, w4, b4)


def pack_params(params, res_size, *, compute_dtype=jnp.float32):
    """Kernel-friendly layout: split W1, zero-pad hidden/out widths to 128 lanes.

    Zero padding is exact: padded pre-activations are 0, lrelu(0) = 0, and the
    padded weight rows/cols contribute nothing downstream.
    """
    w1, b1, w2, b2, w3, b3, w4, b4 = params
    ndh = w2.shape[0]
    hid = _round_up(ndh, _LANE)
    out_pad = _LANE

    def pad2(w, rows, cols):
        return jnp.pad(w, ((0, rows - w.shape[0]), (0, cols - w.shape[1])))

    w1x = pad2(w1[:res_size], res_size, hid).astype(compute_dtype)
    w1a = pad2(w1[res_size:], w1.shape[0] - res_size, hid).astype(compute_dtype)
    w2p = pad2(w2, hid, hid).astype(compute_dtype)
    w3p = pad2(w3, hid, hid).astype(compute_dtype)
    w4p = pad2(w4, hid, out_pad).astype(compute_dtype)
    # Biases stay f32 (bias add + lrelu run in f32 regardless of compute dtype).
    b1p = pad2(b1.reshape(1, -1), 1, hid).astype(jnp.float32)
    b2p = pad2(b2.reshape(1, -1), 1, hid).astype(jnp.float32)
    b3p = pad2(b3.reshape(1, -1), 1, hid).astype(jnp.float32)
    b4p = pad2(b4.reshape(1, -1), 1, out_pad).astype(jnp.float32)
    return (w1x, w1a, b1p, w2p, b2p, w3p, b3p, w4p, b4p)


def mlp_3hl_critic(x, att, packed, *, tile_b=256):
    """Pallas forward pass. x: (B, resSize), att: (B, attSize) -> (B, 1)."""
    w1x, w1a, b1, w2, b2, w3, b3, w4, b4 = packed
    B, res = x.shape
    att_dim = att.shape[1]
    out_pad = w4.shape[1]

    # Batch tiling (tile must be a multiple of 8 sublanes).
    tile_b = _round_up(tile_b, _SUBLANE)
    b_pad = _round_up(max(B, _SUBLANE), _SUBLANE)
    if b_pad <= tile_b:
        tile_b = b_pad
    else:
        b_pad = _round_up(B, tile_b)
    if b_pad != B:
        x = jnp.pad(x, ((0, b_pad - B), (0, 0)))
        att = jnp.pad(att, ((0, b_pad - B), (0, 0)))

    grid = (b_pad // tile_b,)
    batch_map = lambda i: (i, 0)
    const_map = lambda i: (0, 0)   # weights/biases stay VMEM-resident

    out = pl.pallas_call(
        critic_kernel,
        out_shape=jax.ShapeDtypeStruct((b_pad, out_pad), jnp.float32),
        grid=grid,
        in_specs=[
            pl.BlockSpec((tile_b, res), batch_map),
            pl.BlockSpec((tile_b, att_dim), batch_map),
            pl.BlockSpec(w1x.shape, const_map),
            pl.BlockSpec(w1a.shape, const_map),
            pl.BlockSpec(b1.shape, const_map),
            pl.BlockSpec(w2.shape, const_map),
            pl.BlockSpec(b2.shape, const_map),
            pl.BlockSpec(w3.shape, const_map),
            pl.BlockSpec(b3.shape, const_map),
            pl.BlockSpec(w4.shape, const_map),
            pl.BlockSpec(b4.shape, const_map),
        ],
        out_specs=pl.BlockSpec((tile_b, out_pad), batch_map),
        compiler_params=pltpu.CompilerParams(
            dimension_semantics=("parallel",)),
    )(x, att, w1x, w1a, b1, w2, b2, w3, b3, w4, b4)

    # Lane-dense (b_pad, 128) slab -> the real (B, 1) result.
    return out[:B, :1]


def reference(x, att, params, compute_dtype=jnp.float32):
    """Pure-JAX reference with the same cast points as the kernel."""
    w1, b1, w2, b2, w3, b3, w4, b4 = params
    cdt = compute_dtype
    h = jnp.concatenate([x, att], axis=1)
    h = _lrelu(jnp.dot(h.astype(cdt), w1.astype(cdt),
                       preferred_element_type=jnp.float32) + b1)
    h = _lrelu(jnp.dot(h.astype(cdt), w2.astype(cdt),
                       preferred_element_type=jnp.float32) + b2)
    h = _lrelu(jnp.dot(h.astype(cdt), w3.astype(cdt),
                       preferred_element_type=jnp.float32) + b3)
    return jnp.dot(h.astype(cdt), w4.astype(cdt),
                   preferred_element_type=jnp.float32) + b4


if __name__ == "__main__":
    # Shapes consistent with the module: resSize=32, attSize=16, ndh=64.
    # B=100 exercises batch padding + a multi-step ("parallel") grid.
    B, res_size, att_size, ndh = 100, 32, 16, 64

    key = jax.random.PRNGKey(0)
    kx, ka, kp = jax.random.split(key, 3)
    x = jax.random.normal(kx, (B, res_size), dtype=jnp.float32)
    att = jax.random.normal(ka, (B, att_size), dtype=jnp.float32)
    params = init_params(kp, res_size, att_size, ndh)

    # f32 matmul operands (exact parity with the PyTorch module).
    packed_f32 = pack_params(params, res_size, compute_dtype=jnp.float32)
    out_f32 = jax.block_until_ready(mlp_3hl_critic(x, att, packed_f32, tile_b=64))
    ref_f32 = reference(x, att, params, compute_dtype=jnp.float32)
    assert out_f32.shape == (B, 1)
    assert jnp.allclose(out_f32, ref_f32, atol=1e-5, rtol=1e-4)

    # bf16 matmul operands (v6e/v7x MXU fast path), f32 accumulation; compared
    # against a reference with identical cast points.
    packed_bf16 = pack_params(params, res_size, compute_dtype=jnp.bfloat16)
    out_bf16 = jax.block_until_ready(mlp_3hl_critic(x, att, packed_bf16, tile_b=64))
    ref_bf16 = reference(x, att, params, compute_dtype=jnp.bfloat16)
    assert out_bf16.shape == (B, 1)
    assert jnp.allclose(out_bf16, ref_bf16, atol=3e-5, rtol=5e-2)

    print("KERNEL_OK")
</pallas_src>

<mosaic_0001>
module attributes {stable_mosaic.version = 11 : i64} {
  func.func @critic_kernel(%arg0: i32, %arg1: memref<64x32xf32, #tpu.memory_space<vmem>>, %arg2: memref<64x16xf32, #tpu.memory_space<vmem>>, %arg3: memref<32x128xf32, #tpu.memory_space<vmem>>, %arg4: memref<16x128xf32, #tpu.memory_space<vmem>>, %arg5: memref<1x128xf32, #tpu.memory_space<vmem>>, %arg6: memref<128x128xf32, #tpu.memory_space<vmem>>, %arg7: memref<1x128xf32, #tpu.memory_space<vmem>>, %arg8: memref<128x128xf32, #tpu.memory_space<vmem>>, %arg9: memref<1x128xf32, #tpu.memory_space<vmem>>, %arg10: memref<128x128xf32, #tpu.memory_space<vmem>>, %arg11: memref<1x128xf32, #tpu.memory_space<vmem>>, %arg12: memref<64x128xf32, #tpu.memory_space<vmem>>) attributes {dimension_semantics = [#tpu.dimension_semantics<parallel>], iteration_bounds = array<i64: 2>, scalar_prefetch = 0 : i64, scratch_operands = 0 : i64, tpu.core_type = #tpu.core_type<tc>, window_params = [{transform_indices = @transform_0, window_bounds = array<i64: 64, 32>}, {transform_indices = @transform_1, window_bounds = array<i64: 64, 16>}, {pipeline_mode = #tpu.pipeline_mode<synchronous>, transform_indices = @transform_2, window_bounds = array<i64: 32, 128>}, {pipeline_mode = #tpu.pipeline_mode<synchronous>, transform_indices = @transform_3, window_bounds = array<i64: 16, 128>}, {pipeline_mode = #tpu.pipeline_mode<synchronous>, transform_indices = @transform_4, window_bounds = array<i64: 1, 128>}, {pipeline_mode = #tpu.pipeline_mode<synchronous>, transform_indices = @transform_5, window_bounds = array<i64: 128, 128>}, {pipeline_mode = #tpu.pipeline_mode<synchronous>, transform_indices = @transform_6, window_bounds = array<i64: 1, 128>}, {pipeline_mode = #tpu.pipeline_mode<synchronous>, transform_indices = @transform_7, window_bounds = array<i64: 128, 128>}, {pipeline_mode = #tpu.pipeline_mode<synchronous>, transform_indices = @transform_8, window_bounds = array<i64: 1, 128>}, {pipeline_mode = #tpu.pipeline_mode<synchronous>, transform_indices = @transform_9, window_bounds = array<i64: 128, 128>}, {pipeline_mode = #tpu.pipeline_mode<synchronous>, transform_indices = @transform_10, window_bounds = array<i64: 1, 128>}, {transform_indices = @transform_11, window_bounds = array<i64: 64, 128>}]} {
    %c0 = arith.constant 0 : index
    %c0_0 = arith.constant 0 : index
    %0 = vector.load %arg1[%c0, %c0_0] : memref<64x32xf32, #tpu.memory_space<vmem>>, vector<64x32xf32>
    %c0_1 = arith.constant 0 : index
    %c0_2 = arith.constant 0 : index
    %1 = vector.load %arg3[%c0_1, %c0_2] : memref<32x128xf32, #tpu.memory_space<vmem>>, vector<32x128xf32>
    %cst = arith.constant dense<0.000000e+00> : vector<64x128xf32>
    %2 = tpu.matmul %0, %1, %cst {dimension_numbers = #tpu.dot_dimension_numbers<[1], [0], [0], [1], [0, 0, 1, 1], [], []>} : vector<64x32xf32>, vector<32x128xf32>, vector<64x128xf32> -> vector<64x128xf32>
    %c0_3 = arith.constant 0 : index
    %c0_4 = arith.constant 0 : index
    %3 = vector.load %arg2[%c0_3, %c0_4] : memref<64x16xf32, #tpu.memory_space<vmem>>, vector<64x16xf32>
    %c0_5 = arith.constant 0 : index
    %c0_6 = arith.constant 0 : index
    %4 = vector.load %arg4[%c0_5, %c0_6] : memref<16x128xf32, #tpu.memory_space<vmem>>, vector<16x128xf32>
    %cst_7 = arith.constant dense<0.000000e+00> : vector<64x128xf32>
    %5 = tpu.matmul %3, %4, %cst_7 {dimension_numbers = #tpu.dot_dimension_numbers<[1], [0], [0], [1], [0, 0, 1, 1], [], []>} : vector<64x16xf32>, vector<16x128xf32>, vector<64x128xf32> -> vector<64x128xf32>
    %6 = arith.addf %2, %5 : vector<64x128xf32>
    %c0_8 = arith.constant 0 : index
    %c0_9 = arith.constant 0 : index
    %7 = vector.load %arg5[%c0_8, %c0_9] : memref<1x128xf32, #tpu.memory_space<vmem>>, vector<1x128xf32>
    %8 = vector.broadcast %7 : vector<1x128xf32> to vector<64x128xf32>
    %9 = arith.addf %6, %8 : vector<64x128xf32>
    %cst_10 = arith.constant 0.000000e+00 : f32
    %10 = vector.broadcast %cst_10 : f32 to vector<64x128xf32>
    %11 = arith.cmpf oge, %9, %10 : vector<64x128xf32>
    %cst_11 = arith.constant 2.000000e-01 : f32
    %12 = vector.broadcast %cst_11 : f32 to vector<64x128xf32>
    %13 = arith.mulf %12, %9 : vector<64x128xf32>
    %14 = arith.select %11, %9, %13 : vector<64x128xi1>, vector<64x128xf32>
    %c0_12 = arith.constant 0 : index
    %c0_13 = arith.constant 0 : index
    %15 = vector.load %arg6[%c0_12, %c0_13] : memref<128x128xf32, #tpu.memory_space<vmem>>, vector<128x128xf32>
    %cst_14 = arith.constant dense<0.000000e+00> : vector<64x128xf32>
    %16 = tpu.matmul %14, %15, %cst_14 {dimension_numbers = #tpu.dot_dimension_numbers<[1], [0], [0], [1], [0, 0, 1, 1], [], []>} : vector<64x128xf32>, vector<128x128xf32>, vector<64x128xf32> -> vector<64x128xf32>
    %c0_15 = arith.constant 0 : index
    %c0_16 = arith.constant 0 : index
    %17 = vector.load %arg7[%c0_15, %c0_16] : memref<1x128xf32, #tpu.memory_space<vmem>>, vector<1x128xf32>
    %18 = vector.broadcast %17 : vector<1x128xf32> to vector<64x128xf32>
    %19 = arith.addf %16, %18 : vector<64x128xf32>
    %cst_17 = arith.constant 0.000000e+00 : f32
    %20 = vector.broadcast %cst_17 : f32 to vector<64x128xf32>
    %21 = arith.cmpf oge, %19, %20 : vector<64x128xf32>
    %cst_18 = arith.constant 2.000000e-01 : f32
    %22 = vector.broadcast %cst_18 : f32 to vector<64x128xf32>
    %23 = arith.mulf %22, %19 : vector<64x128xf32>
    %24 = arith.select %21, %19, %23 : vector<64x128xi1>, vector<64x128xf32>
    %c0_19 = arith.constant 0 : index
    %c0_20 = arith.constant 0 : index
    %25 = vector.load %arg8[%c0_19, %c0_20] : memref<128x128xf32, #tpu.memory_space<vmem>>, vector<128x128xf32>
    %cst_21 = arith.constant dense<0.000000e+00> : vector<64x128xf32>
    %26 = tpu.matmul %24, %25, %cst_21 {dimension_numbers = #tpu.dot_dimension_numbers<[1], [0], [0], [1], [0, 0, 1, 1], [], []>} : vector<64x128xf32>, vector<128x128xf32>, vector<64x128xf32> -> vector<64x128xf32>
    %c0_22 = arith.constant 0 : index
    %c0_23 = arith.constant 0 : index
    %27 = vector.load %arg9[%c0_22, %c0_23] : memref<1x128xf32, #tpu.memory_space<vmem>>, vector<1x128xf32>
    %28 = vector.broadcast %27 : vector<1x128xf32> to vector<64x128xf32>
    %29 = arith.addf %26, %28 : vector<64x128xf32>
    %cst_24 = arith.constant 0.000000e+00 : f32
    %30 = vector.broadcast %cst_24 : f32 to vector<64x128xf32>
    %31 = arith.cmpf oge, %29, %30 : vector<64x128xf32>
    %cst_25 = arith.constant 2.000000e-01 : f32
    %32 = vector.broadcast %cst_25 : f32 to vector<64x128xf32>
    %33 = arith.mulf %32, %29 : vector<64x128xf32>
    %34 = arith.select %31, %29, %33 : vector<64x128xi1>, vector<64x128xf32>
    %c0_26 = arith.constant 0 : index
    %c0_27 = arith.constant 0 : index
    %35 = vector.load %arg10[%c0_26, %c0_27] : memref<128x128xf32, #tpu.memory_space<vmem>>, vector<128x128xf32>
    %cst_28 = arith.constant dense<0.000000e+00> : vector<64x128xf32>
    %36 = tpu.matmul %34, %35, %cst_28 {dimension_numbers = #tpu.dot_dimension_numbers<[1], [0], [0], [1], [0, 0, 1, 1], [], []>} : vector<64x128xf32>, vector<128x128xf32>, vector<64x128xf32> -> vector<64x128xf32>
    %c0_29 = arith.constant 0 : index
    %c0_30 = arith.constant 0 : index
    %37 = vector.load %arg11[%c0_29, %c0_30] : memref<1x128xf32, #tpu.memory_space<vmem>>, vector<1x128xf32>
    %38 = vector.broadcast %37 : vector<1x128xf32> to vector<64x128xf32>
    %39 = arith.addf %36, %38 : vector<64x128xf32>
    %c0_31 = arith.constant 0 : index
    %c0_32 = arith.constant 0 : index
    %40 = vector.load %arg12[%c0_31, %c0_32] : memref<64x128xf32, #tpu.memory_space<vmem>>, vector<64x128xf32>
    tpu.vector_store %arg12[%c0_31, %c0_32], %39 {strides = array<i32>} : memref<64x128xf32, #tpu.memory_space<vmem>>, vector<64x128xf32>,
    return
  }
  func.func @transform_0(%arg0: i32) -> (i32, i32) {
    %c0_i32 = arith.constant 0 : i32
    %c0_i32_0 = arith.constant 0 : i32
    return %arg0, %c0_i32 : i32, i32
  }
  func.func @transform_1(%arg0: i32) -> (i32, i32) {
    %c0_i32 = arith.constant 0 : i32
    %c0_i32_0 = arith.constant 0 : i32
    return %arg0, %c0_i32 : i32, i32
  }
  func.func @transform_2(%arg0: i32) -> (i32, i32) {
    %c0_i32 = arith.constant 0 : i32
    %c0_i32_0 = arith.constant 0 : i32
    %c0_i32_1 = arith.constant 0 : i32
    return %c0_i32, %c0_i32_0 : i32, i32
  }
  func.func @transform_3(%arg0: i32) -> (i32, i32) {
    %c0_i32 = arith.constant 0 : i32
    %c0_i32_0 = arith.constant 0 : i32
    %c0_i32_1 = arith.constant 0 : i32
    return %c0_i32, %c0_i32_0 : i32, i32
  }
  func.func @transform_4(%arg0: i32) -> (i32, i32) {
    %c0_i32 = arith.constant 0 : i32
    %c0_i32_0 = arith.constant 0 : i32
    %c0_i32_1 = arith.constant 0 : i32
    return %c0_i32, %c0_i32_0 : i32, i32
  }
  func.func @transform_5(%arg0: i32) -> (i32, i32) {
    %c0_i32 = arith.constant 0 : i32
    %c0_i32_0 = arith.constant 0 : i32
    %c0_i32_1 = arith.constant 0 : i32
    return %c0_i32, %c0_i32_0 : i32, i32
  }
  func.func @transform_6(%arg0: i32) -> (i32, i32) {
    %c0_i32 = arith.constant 0 : i32
    %c0_i32_0 = arith.constant 0 : i32
    %c0_i32_1 = arith.constant 0 : i32
    return %c0_i32, %c0_i32_0 : i32, i32
  }
  func.func @transform_7(%arg0: i32) -> (i32, i32) {
    %c0_i32 = arith.constant 0 : i32
    %c0_i32_0 = arith.constant 0 : i32
    %c0_i32_1 = arith.constant 0 : i32
    return %c0_i32, %c0_i32_0 : i32, i32
  }
  func.func @transform_8(%arg0: i32) -> (i32, i32) {
    %c0_i32 = arith.constant 0 : i32
    %c0_i32_0 = arith.constant 0 : i32
    %c0_i32_1 = arith.constant 0 : i32
    return %c0_i32, %c0_i32_0 : i32, i32
  }
  func.func @transform_9(%arg0: i32) -> (i32, i32) {
    %c0_i32 = arith.constant 0 : i32
    %c0_i32_0 = arith.constant 0 : i32
    %c0_i32_1 = arith.constant 0 : i32
    return %c0_i32, %c0_i32_0 : i32, i32
  }
  func.func @transform_10(%arg0: i32) -> (i32, i32) {
    %c0_i32 = arith.constant 0 : i32
    %c0_i32_0 = arith.constant 0 : i32
    %c0_i32_1 = arith.constant 0 : i32
    return %c0_i32, %c0_i32_0 : i32, i32
  }
  func.func @transform_11(%arg0: i32) -> (i32, i32) {
    %c0_i32 = arith.constant 0 : i32
    %c0_i32_0 = arith.constant 0 : i32
    return %arg0, %c0_i32 : i32, i32
  }
}

</mosaic_0001>

<llo_original>
// kernel: tpu_custom_call.1
$region0: #{tpu_custom_call.1}
  #allocation0 [shape = 'u32[]', space=smem, size = 0x4, offset = 0x4, fixed_abs, tag = 'smem constant byte address 0x4 - core index']
  #allocation1 [shape = 'u32[144,128]{1,0:T(1,128)}', space=vmem, size = 0x12000, scoped, tag = 'internal scratch']
  %s0 = inlined_call_operand.vmem [shape: f32[128,32], index: 0, kind: input, shape index: {}]
  %s1 = inlined_call_operand.vmem [shape: f32[128,16], index: 1, kind: input, shape index: {}]
  %s2 = inlined_call_operand.vmem [shape: f32[32,128], index: 2, kind: input, shape index: {}]
  %s3 = inlined_call_operand.hbm [shape: f32[16,128], index: 3, kind: input, shape index: {}]
  %s4 = inlined_call_operand.vmem [shape: f32[1,128], index: 4, kind: input, shape index: {}]
  %s5 = inlined_call_operand.vmem [shape: f32[128,128], index: 5, kind: input, shape index: {}]
  %s6 = inlined_call_operand.vmem [shape: f32[1,128], index: 6, kind: input, shape index: {}]
  %s7 = inlined_call_operand.vmem [shape: f32[128,128], index: 7, kind: input, shape index: {}]
  %s8 = inlined_call_operand.vmem [shape: f32[1,128], index: 8, kind: input, shape index: {}]
  %s9 = inlined_call_operand.hbm [shape: f32[128,128], index: 9, kind: input, shape index: {}]
  %s10 = inlined_call_operand.vmem [shape: f32[1,128], index: 10, kind: input, shape index: {}]
  %s11 = inlined_call_operand.hbm [shape: f32[128,128], index: 11, kind: output, shape index: {}]
  %s12 = sld [smem:[#allocation0]]
  $region85: #{tpu_custom_call.1} parent=0
    _
  %s14 = ssub.s32 1, %s12
  %s15 = scalar_select 0, %s14, %s12
  $region1: #{tpu_custom_call.1} parent=0
    #allocation2 [shape = 'u8[8192]{0}', space=vmem, size = 0x2000, scoped, tag = 'input window, operand 3, single buffered']
    #allocation3 [shape = 's32[2]{0}', space=sflag, size = 0x8, scoped, tag = 'scoped memory for tpu_custom_call.1']
    #allocation4 [shape = 's32[2]{0}', space=sflag, size = 0x8, scoped, tag = 'scoped memory for tpu_custom_call.1']
    #allocation5 [shape = 'u8[65536]{0}', space=vmem, size = 0x10000, scoped, tag = 'input window, operand 9, single buffered']
    #allocation6 [shape = 's32[1]{0}', space=sflag, size = 0x4, scoped, tag = 'scoped memory for tpu_custom_call.1']
    #allocation7 [shape = 'u8[65536]{0}', space=vmem, size = 0x10000, scoped, tag = 'output window, operand 0']
    %16 = vsyncpa [#allocation3], 0
    %17 = vsyncpa [#allocation6], 0
    %18 = vsyncpa [#allocation4], 0
    %s19 = scalar_lea.sflag [#allocation4], 1
    %20 = vsyncpa %s19, 0
    loop: start=0, step=1, limit=4
    $region2: #{tpu_custom_call.1} parent=1 // loop_pre_header
      _
    $region3: #{tpu_custom_call.1} parent=1 // loop_header
      %s22 = sphi 0, %s26
      %p23 = scmp.ge.s32.totalorder %s22, 4
      %s32 = sphi 0, %s34
      %s35 = sphi 0, %s32
      %s36 = sphi 0, %s35
      %s52 = sphi 0, %s36
      %s58 = sphi 0, %s60
      %s61 = sphi 0, %s58
      %s62 = sphi 0, %s61
      %s78 = sphi 0, %s62
      %s82 = sphi 0, %s82
      %s84 = sphi 0, %s82
      %s85 = sphi 0, %s84
      %s99 = sphi 0, %s85
      %s103 = sphi 0, %s103
      %s105 = sphi 0, %s103
      %s106 = sphi 0, %s105
      %s120 = sphi 0, %s106
      %s124 = sphi 0, %s124
      %s126 = sphi 0, %s124
      %s127 = sphi 0, %s126
      %s141 = sphi 0, %s127
      %s145 = sphi 0, %s145
      %s147 = sphi 0, %s145
      %s148 = sphi 0, %s147
      %s162 = sphi 0, %s148
      %s166 = sphi 0, %s166
      %s168 = sphi 0, %s166
      %s169 = sphi 0, %s168
      %s183 = sphi 0, %s169
      %s187 = sphi 0, %s187
      %s189 = sphi 0, %s187
      %s190 = sphi 0, %s189
      %s204 = sphi 0, %s190
      %s208 = sphi 0, %s208
      %s210 = sphi 0, %s208
      %s211 = sphi 0, %s210
      %s225 = sphi 0, %s211
      %s229 = sphi 0, %s229
      %s231 = sphi 0, %s229
      %s232 = sphi 0, %s231
      %s246 = sphi 0, %s232
      %s250 = sphi 0, %s250
      %s252 = sphi 0, %s250
      %s253 = sphi 0, %s252
      %s267 = sphi 0, %s253
      %s273 = sphi 0, %s275
      %s276 = sphi 0, %s273
      %s277 = sphi 0, %s276
      %s293 = sphi 0, %s277
    $region4: #{tpu_custom_call.1} parent=1 // loop_header_branch
      %25 = sbr.rel (%p23) target = $region8
    $region5: #{tpu_custom_call.1} parent=1 // loop_body
      %s27 = ssub.s32 %s22, 1
      %s28 = ssub.s32 %s22, 2
      %s29 = sadd.s32 %s22, 1
      %s30 = ssub.s32 %s22, %s29
      %p31 = scmp.eq.s32.totalorder %s30, 0
      %s33 = sadd.s32 %s32, 1
      %s34 = scalar_select %p31, %s32, %s33
      %p37 = pneg %p31
      %p38 = scmp.eq.s32.totalorder %s22, 1
      %p39 = por %p37, %p38
      %p40 = scmp.ne.s32.totalorder %s32, %s35
      %p41 = scmp.eq.s32.totalorder %s22, 0
      %p42 = por %p40, %p41
      %p43 = scmp.ne.s32.totalorder %s32, %s35
      %p44 = scmp.eq.s32.totalorder %s27, 1
      %p45 = por %p43, %p44
      %p46 = scmp.ne.s32.totalorder %s35, %s36
      %p47 = scmp.eq.s32.totalorder %s27, 0
      %p48 = por %p46, %p47
      %p49 = scmp.ne.s32.totalorder %s35, %s36
      %p50 = scmp.eq.s32.totalorder %s28, 1
      %p51 = por %p49, %p50
      %p53 = scmp.ne.s32.totalorder %s36, %s52
      %p54 = scmp.eq.s32.totalorder %s28, 0
      %p55 = por %p53, %p54
      %s56 = ssub.s32 %s22, %s29
      %p57 = scmp.eq.s32.totalorder %s56, 0
      %s59 = sadd.s32 %s58, 1
      %s60 = scalar_select %p57, %s58, %s59
      %p63 = pneg %p57
      %p64 = scmp.eq.s32.totalorder %s22, 1
      %p65 = por %p63, %p64
      %p66 = scmp.ne.s32.totalorder %s58, %s61
      %p67 = scmp.eq.s32.totalorder %s22, 0
      %p68 = por %p66, %p67
      %p69 = scmp.ne.s32.totalorder %s58, %s61
      %p70 = scmp.eq.s32.totalorder %s27, 1
      %p71 = por %p69, %p70
      %p72 = scmp.ne.s32.totalorder %s61, %s62
      %p73 = scmp.eq.s32.totalorder %s27, 0
      %p74 = por %p72, %p73
      %p75 = scmp.ne.s32.totalorder %s61, %s62
      %p76 = scmp.eq.s32.totalorder %s28, 1
      %p77 = por %p75, %p76
      %p79 = scmp.ne.s32.totalorder %s62, %s78
      %p80 = scmp.eq.s32.totalorder %s28, 0
      %p81 = por %p79, %p80
      %s83 = sadd.s32 %s82, 1
      %p86 = scmp.eq.s32.totalorder %s22, 1
      %p87 = scmp.ne.s32.totalorder %s82, %s84
      %p88 = scmp.eq.s32.totalorder %s22, 0
      %p89 = por %p87, %p88
      %p90 = scmp.ne.s32.totalorder %s82, %s84
      %p91 = scmp.eq.s32.totalorder %s27, 1
      %p92 = por %p90, %p91
      %p93 = scmp.ne.s32.totalorder %s84, %s85
      %p94 = scmp.eq.s32.totalorder %s27, 0
      %p95 = por %p93, %p94
      %p96 = scmp.ne.s32.totalorder %s84, %s85
      %p97 = scmp.eq.s32.totalorder %s28, 1
      %p98 = por %p96, %p97
      %p100 = scmp.ne.s32.totalorder %s85, %s99
      %p101 = scmp.eq.s32.totalorder %s28, 0
      %p102 = por %p100, %p101
      %s104 = sadd.s32 %s103, 1
      %p107 = scmp.eq.s32.totalorder %s22, 1
      %p108 = scmp.ne.s32.totalorder %s103, %s105
      %p109 = scmp.eq.s32.totalorder %s22, 0
      %p110 = por %p108, %p109
      %p111 = scmp.ne.s32.totalorder %s103, %s105
      %p112 = scmp.eq.s32.totalorder %s27, 1
      %p113 = por %p111, %p112
      %p114 = scmp.ne.s32.totalorder %s105, %s106
      %p115 = scmp.eq.s32.totalorder %s27, 0
      %p116 = por %p114, %p115
      %p117 = scmp.ne.s32.totalorder %s105, %s106
      %p118 = scmp.eq.s32.totalorder %s28, 1
      %p119 = por %p117, %p118
      %p121 = scmp.ne.s32.totalorder %s106, %s120
      %p122 = scmp.eq.s32.totalorder %s28, 0
      %p123 = por %p121, %p122
      %s125 = sadd.s32 %s124, 1
      %p128 = scmp.eq.s32.totalorder %s22, 1
      %p129 = scmp.ne.s32.totalorder %s124, %s126
      %p130 = scmp.eq.s32.totalorder %s22, 0
      %p131 = por %p129, %p130
      %p132 = scmp.ne.s32.totalorder %s124, %s126
      %p133 = scmp.eq.s32.totalorder %s27, 1
      %p134 = por %p132, %p133
      %p135 = scmp.ne.s32.totalorder %s126, %s127
      %p136 = scmp.eq.s32.totalorder %s27, 0
      %p137 = por %p135, %p136
      %p138 = scmp.ne.s32.totalorder %s126, %s127
      %p139 = scmp.eq.s32.totalorder %s28, 1
      %p140 = por %p138, %p139
      %p142 = scmp.ne.s32.totalorder %s127, %s141
      %p143 = scmp.eq.s32.totalorder %s28, 0
      %p144 = por %p142, %p143
      %s146 = sadd.s32 %s145, 1
      %p149 = scmp.eq.s32.totalorder %s22, 1
      %p150 = scmp.ne.s32.totalorder %s145, %s147
      %p151 = scmp.eq.s32.totalorder %s22, 0
      %p152 = por %p150, %p151
      %p153 = scmp.ne.s32.totalorder %s145, %s147
      %p154 = scmp.eq.s32.totalorder %s27, 1
      %p155 = por %p153, %p154
      %p156 = scmp.ne.s32.totalorder %s147, %s148
      %p157 = scmp.eq.s32.totalorder %s27, 0
      %p158 = por %p156, %p157
      %p159 = scmp.ne.s32.totalorder %s147, %s148
      %p160 = scmp.eq.s32.totalorder %s28, 1
      %p161 = por %p159, %p160
      %p163 = scmp.ne.s32.totalorder %s148, %s162
      %p164 = scmp.eq.s32.totalorder %s28, 0
      %p165 = por %p163, %p164
      %s167 = sadd.s32 %s166, 1
      %p170 = scmp.eq.s32.totalorder %s22, 1
      %p171 = scmp.ne.s32.totalorder %s166, %s168
      %p172 = scmp.eq.s32.totalorder %s22, 0
      %p173 = por %p171, %p172
      %p174 = scmp.ne.s32.totalorder %s166, %s168
      %p175 = scmp.eq.s32.totalorder %s27, 1
      %p176 = por %p174, %p175
      %p177 = scmp.ne.s32.totalorder %s168, %s169
      %p178 = scmp.eq.s32.totalorder %s27, 0
      %p179 = por %p177, %p178
      %p180 = scmp.ne.s32.totalorder %s168, %s169
      %p181 = scmp.eq.s32.totalorder %s28, 1
      %p182 = por %p180, %p181
      %p184 = scmp.ne.s32.totalorder %s169, %s183
      %p185 = scmp.eq.s32.totalorder %s28, 0
      %p186 = por %p184, %p185
      %s188 = sadd.s32 %s187, 1
      %p191 = scmp.eq.s32.totalorder %s22, 1
      %p192 = scmp.ne.s32.totalorder %s187, %s189
      %p193 = scmp.eq.s32.totalorder %s22, 0
      %p194 = por %p192, %p193
      %p195 = scmp.ne.s32.totalorder %s187, %s189
      %p196 = scmp.eq.s32.totalorder %s27, 1
      %p197 = por %p195, %p196
      %p198 = scmp.ne.s32.totalorder %s189, %s190
      %p199 = scmp.eq.s32.totalorder %s27, 0
      %p200 = por %p198, %p199
      %p201 = scmp.ne.s32.totalorder %s189, %s190
      %p202 = scmp.eq.s32.totalorder %s28, 1
      %p203 = por %p201, %p202
      %p205 = scmp.ne.s32.totalorder %s190, %s204
      %p206 = scmp.eq.s32.totalorder %s28, 0
      %p207 = por %p205, %p206
      %s209 = sadd.s32 %s208, 1
      %p212 = scmp.eq.s32.totalorder %s22, 1
      %p213 = scmp.ne.s32.totalorder %s208, %s210
      %p214 = scmp.eq.s32.totalorder %s22, 0
      %p215 = por %p213, %p214
      %p216 = scmp.ne.s32.totalorder %s208, %s210
      %p217 = scmp.eq.s32.totalorder %s27, 1
      %p218 = por %p216, %p217
      %p219 = scmp.ne.s32.totalorder %s210, %s211
      %p220 = scmp.eq.s32.totalorder %s27, 0
      %p221 = por %p219, %p220
      %p222 = scmp.ne.s32.totalorder %s210, %s211
      %p223 = scmp.eq.s32.totalorder %s28, 1
      %p224 = por %p222, %p223
      %p226 = scmp.ne.s32.totalorder %s211, %s225
      %p227 = scmp.eq.s32.totalorder %s28, 0
      %p228 = por %p226, %p227
      %s230 = sadd.s32 %s229, 1
      %p233 = scmp.eq.s32.totalorder %s22, 1
      %p234 = scmp.ne.s32.totalorder %s229, %s231
      %p235 = scmp.eq.s32.totalorder %s22, 0
      %p236 = por %p234, %p235
      %p237 = scmp.ne.s32.totalorder %s229, %s231
      %p238 = scmp.eq.s32.totalorder %s27, 1
      %p239 = por %p237, %p238
      %p240 = scmp.ne.s32.totalorder %s231, %s232
      %p241 = scmp.eq.s32.totalorder %s27, 0
      %p242 = por %p240, %p241
      %p243 = scmp.ne.s32.totalorder %s231, %s232
      %p244 = scmp.eq.s32.totalorder %s28, 1
      %p245 = por %p243, %p244
      %p247 = scmp.ne.s32.totalorder %s232, %s246
      %p248 = scmp.eq.s32.totalorder %s28, 0
      %p249 = por %p247, %p248
      %s251 = sadd.s32 %s250, 1
      %p254 = scmp.eq.s32.totalorder %s22, 1
      %p255 = scmp.ne.s32.totalorder %s250, %s252
      %p256 = scmp.eq.s32.totalorder %s22, 0
      %p257 = por %p255, %p256
      %p258 = scmp.ne.s32.totalorder %s250, %s252
      %p259 = scmp.eq.s32.totalorder %s27, 1
      %p260 = por %p258, %p259
      %p261 = scmp.ne.s32.totalorder %s252, %s253
      %p262 = scmp.eq.s32.totalorder %s27, 0
      %p263 = por %p261, %p262
      %p264 = scmp.ne.s32.totalorder %s252, %s253
      %p265 = scmp.eq.s32.totalorder %s28, 1
      %p266 = por %p264, %p265
      %p268 = scmp.ne.s32.totalorder %s253, %s267
      %p269 = scmp.eq.s32.totalorder %s28, 0
      %p270 = por %p268, %p269
      %s271 = ssub.s32 %s22, %s29
      %p272 = scmp.eq.s32.totalorder %s271, 0
      %s274 = sadd.s32 %s273, 1
      %s275 = scalar_select %p272, %s273, %s274
      %p278 = pneg %p272
      %p279 = scmp.eq.s32.totalorder %s22, 1
      %p280 = por %p278, %p279
      %p281 = scmp.ne.s32.totalorder %s273, %s276
      %p282 = scmp.eq.s32.totalorder %s22, 0
      %p283 = por %p281, %p282
      %p284 = scmp.ne.s32.totalorder %s273, %s276
      %p285 = scmp.eq.s32.totalorder %s27, 1
      %p286 = por %p284, %p285
      %p287 = scmp.ne.s32.totalorder %s276, %s277
      %p288 = scmp.eq.s32.totalorder %s27, 0
      %p289 = por %p287, %p288
      %p290 = scmp.ne.s32.totalorder %s276, %s277
      %p291 = scmp.eq.s32.totalorder %s28, 1
      %p292 = por %p290, %p291
      %p294 = scmp.ne.s32.totalorder %s277, %s293
      %p295 = scmp.eq.s32.totalorder %s28, 0
      %p296 = por %p294, %p295
      %p297 = scmp.le.s32.totalorder 1, %s22
      %p298 = scmp.lt.s32.totalorder %s22, 3
      %p299 = pnand %p297, %p298
      %p300 = pneg %p299
      // Predicated region
      $region9: #{tpu_custom_call.1} parent=5 // pred_check
        _
      $region10: #{tpu_custom_call.1} parent=5 // pred_check_branch
        %302 = sbr.rel (%p299) target = $region12
      $region11: #{tpu_custom_call.1} parent=5 // pred_region
        %s303 = ssub.s32 %s22, 1
        // Predicated region
        $region13: #{tpu_custom_call.1} parent=11 // pred_check
          %p304 = pneg %p95
        $region14: #{tpu_custom_call.1} parent=11 // pred_check_branch
          %306 = sbr.rel (%p304) target = $region16
        $region15: #{tpu_custom_call.1} parent=11 // pred_region
          _
        $region16: #{tpu_custom_call.1} parent=11 // pred_fallthru
          _
        // Predicated region
        $region17: #{tpu_custom_call.1} parent=11 // pred_check
          %p307 = pneg %p116
        $region18: #{tpu_custom_call.1} parent=11 // pred_check_branch
          %309 = sbr.rel (%p307) target = $region20
        $region19: #{tpu_custom_call.1} parent=11 // pred_region
          %s311 = ssub.s32 256, 256
          %312 = vsyncadd [#allocation3], %s311
          %s313 = sshll.u32 [#allocation2], 4
          %s314 = int_to_ptr.vmem [resolvable:$true] %s313
          %319 = dma.hbm_to_vmem [thread:$0]  %s3, 256, %s314, [#allocation3], 128, 128, 8
        $region20: #{tpu_custom_call.1} parent=11 // pred_fallthru
          _
        // Predicated region
        $region21: #{tpu_custom_call.1} parent=11 // pred_check
          %p320 = pneg %p137
        $region22: #{tpu_custom_call.1} parent=11 // pred_check_branch
          %322 = sbr.rel (%p320) target = $region24
        $region23: #{tpu_custom_call.1} parent=11 // pred_region
          _
        $region24: #{tpu_custom_call.1} parent=11 // pred_fallthru
          _
        // Predicated region
        $region25: #{tpu_custom_call.1} parent=11 // pred_check
          %p323 = pneg %p158
        $region26: #{tpu_custom_call.1} parent=11 // pred_check_branch
          %325 = sbr.rel (%p323) target = $region28
        $region27: #{tpu_custom_call.1} parent=11 // pred_region
          _
        $region28: #{tpu_custom_call.1} parent=11 // pred_fallthru
          _
        // Predicated region
        $region29: #{tpu_custom_call.1} parent=11 // pred_check
          %p326 = pneg %p179
        $region30: #{tpu_custom_call.1} parent=11 // pred_check_branch
          %328 = sbr.rel (%p326) target = $region32
        $region31: #{tpu_custom_call.1} parent=11 // pred_region
          _
        $region32: #{tpu_custom_call.1} parent=11 // pred_fallthru
          _
        // Predicated region
        $region33: #{tpu_custom_call.1} parent=11 // pred_check
          %p329 = pneg %p200
        $region34: #{tpu_custom_call.1} parent=11 // pred_check_branch
          %331 = sbr.rel (%p329) target = $region36
        $region35: #{tpu_custom_call.1} parent=11 // pred_region
          _
        $region36: #{tpu_custom_call.1} parent=11 // pred_fallthru
          _
        // Predicated region
        $region37: #{tpu_custom_call.1} parent=11 // pred_check
          %p332 = pneg %p221
        $region38: #{tpu_custom_call.1} parent=11 // pred_check_branch
          %334 = sbr.rel (%p332) target = $region40
        $region39: #{tpu_custom_call.1} parent=11 // pred_region
          _
        $region40: #{tpu_custom_call.1} parent=11 // pred_fallthru
          _
        // Predicated region
        $region41: #{tpu_custom_call.1} parent=11 // pred_check
          %p335 = pneg %p242
        $region42: #{tpu_custom_call.1} parent=11 // pred_check_branch
          %337 = sbr.rel (%p335) target = $region44
        $region43: #{tpu_custom_call.1} parent=11 // pred_region
          %s339 = ssub.s32 2048, 2048
          %340 = vsyncadd [#allocation6], %s339
          %s341 = sshll.u32 [#allocation5], 4
          %s342 = int_to_ptr.vmem [resolvable:$true] %s341
          %347 = dma.hbm_to_vmem [thread:$0]  %s9, 2048, %s342, [#allocation6], 128, 128, 8
        $region44: #{tpu_custom_call.1} parent=11 // pred_fallthru
          _
        // Predicated region
        $region45: #{tpu_custom_call.1} parent=11 // pred_check
          %p348 = pneg %p263
        $region46: #{tpu_custom_call.1} parent=11 // pred_check_branch
          %350 = sbr.rel (%p348) target = $region48
        $region47: #{tpu_custom_call.1} parent=11 // pred_region
          _
        $region48: #{tpu_custom_call.1} parent=11 // pred_fallthru
          _
      $region12: #{tpu_custom_call.1} parent=5 // pred_fallthru
        _
      %p351 = scmp.lt.s32.totalorder %s22, 2
      // Predicated region
      $region49: #{tpu_custom_call.1} parent=5 // pred_check
        %p352 = pneg %p351
      $region50: #{tpu_custom_call.1} parent=5 // pred_check_branch
        %354 = sbr.rel (%p352) target = $region52
      $region51: #{tpu_custom_call.1} parent=5 // pred_region
        // Predicated region
        $region53: #{tpu_custom_call.1} parent=51 // pred_check
          %p355 = pneg %p42
        $region54: #{tpu_custom_call.1} parent=51 // pred_check_branch
          %357 = sbr.rel (%p355) target = $region56
        $region55: #{tpu_custom_call.1} parent=51 // pred_region
          %s358 = smul.u32 8, %s22
          %p359 = scmp.lt.s32.totalorder %s358, 15
          %s360 = scalar_select %p359, %s358, 15
          %s361 = smul.addr %s360, 8
          %s362 = scalar_lea.vmem %s0, %s361
          %s363 = smul.u32 8, %s22
        $region56: #{tpu_custom_call.1} parent=51 // pred_fallthru
          _
        // Predicated region
        $region57: #{tpu_custom_call.1} parent=51 // pred_check
          %p364 = pneg %p68
        $region58: #{tpu_custom_call.1} parent=51 // pred_check_branch
          %366 = sbr.rel (%p364) target = $region60
        $region59: #{tpu_custom_call.1} parent=51 // pred_region
          %s367 = smul.u32 8, %s22
          %p368 = scmp.lt.s32.totalorder %s367, 15
          %s369 = scalar_select %p368, %s367, 15
          %s370 = smul.addr %s369, 8
          %s371 = scalar_lea.vmem %s1, %s370
          %s372 = smul.u32 8, %s22
        $region60: #{tpu_custom_call.1} parent=51 // pred_fallthru
          _
      $region52: #{tpu_custom_call.1} parent=5 // pred_fallthru
        _
      %p373 = scmp.le.s32.totalorder 1, %s22
      %p374 = scmp.lt.s32.totalorder %s22, 3
      %p375 = pnand %p373, %p374
      %p376 = pneg %p375
      // Predicated region
      $region61: #{tpu_custom_call.1} parent=5 // pred_check
        _
      $region62: #{tpu_custom_call.1} parent=5 // pred_check_branch
        %378 = sbr.rel (%p375) target = $region64
      $region63: #{tpu_custom_call.1} parent=5 // pred_region
        %s379 = ssub.s32 %s22, 1
        // Predicated region
        $region65: #{tpu_custom_call.1} parent=63 // pred_check
          %p380 = pneg %p116
        $region66: #{tpu_custom_call.1} parent=63 // pred_check_branch
          %382 = sbr.rel (%p380) target = $region68
        $region67: #{tpu_custom_call.1} parent=63 // pred_region
          %383 = dma.done [#allocation3], 256
        $region68: #{tpu_custom_call.1} parent=63 // pred_fallthru
          _
        // Predicated region
        $region69: #{tpu_custom_call.1} parent=63 // pred_check
          %p384 = pneg %p242
        $region70: #{tpu_custom_call.1} parent=63 // pred_check_branch
          %386 = sbr.rel (%p384) target = $region72
        $region71: #{tpu_custom_call.1} parent=63 // pred_region
          %387 = dma.done [#allocation6], 2048
        $region72: #{tpu_custom_call.1} parent=63 // pred_fallthru
          _
        %s388 = smul.u32 8, %s27
        %p389 = scmp.lt.s32.totalorder %s388, 15
        %s390 = scalar_select %p389, %s388, 15
        %s391 = smul.addr %s390, 8
        %s392 = scalar_lea.vmem %s0, %s391
        %p393 = pneg %p48
        %p394 = pneg %p45
        %s395 = smul.u32 8, %s27
        %p396 = scmp.lt.s32.totalorder %s395, 15
        %s397 = scalar_select %p396, %s395, 15
        %s398 = smul.addr %s397, 8
        %s399 = scalar_lea.vmem %s1, %s398
        %p400 = pneg %p74
        %p401 = pneg %p71
        %p402 = pneg %p95
        %p403 = pneg %p92
        %p404 = pneg %p116
        %p405 = pneg %p113
        %p406 = pneg %p137
        %p407 = pneg %p134
        %p408 = pneg %p158
        %p409 = pneg %p155
        %p410 = pneg %p179
        %p411 = pneg %p176
        %p412 = pneg %p200
        %p413 = pneg %p197
        %p414 = pneg %p221
        %p415 = pneg %p218
        %p416 = pneg %p242
        %p417 = pneg %p239
        %p418 = pneg %p263
        %p419 = pneg %p260
        %p420 = pneg %p289
        %p421 = pneg %p286
        %s422 = sand.u32 %s276, 1
        %s423 = scalar_lea.sflag [#allocation4], %s422
        %s424 = sand.u32 %s276, 1
        %s425 = smul.addr %s424, 64
        %s426 = scalar_lea.vmem [#allocation7], %s425
        %s427 = smul.u32 8, %s27
        %p428 = scmp.lt.s32.totalorder %s427, 15
        %s429 = scalar_select %p428, %s427, 15
        %s430 = smul.addr %s429, 8
        %s431 = scalar_lea.vmem %s0, %s430
        %s432 = smul.u32 8, %s27
        %s433 = smul.u32 8, %s27
        %p434 = scmp.lt.s32.totalorder %s433, 15
        %s435 = scalar_select %p434, %s433, 15
        %s436 = smul.addr %s435, 8
        %s437 = scalar_lea.vmem %s1, %s436
        %s438 = smul.u32 8, %s27
        %s439 = smul.u32 8, %s27
        %v440 = vld [vmem:[%s431] sm:$0xff]
        %v441 = vld [vmem:[%s431 + $0x8] sm:$0xff]
        %v442 = vld [vmem:[%s431 + $0x10] sm:$0xff]
        %v443 = vld [vmem:[%s431 + $0x18] sm:$0xff]
        %v444 = vld [vmem:[%s431 + $0x20] sm:$0xff]
        %v445 = vld [vmem:[%s431 + $0x28] sm:$0xff]
        %v446 = vld [vmem:[%s431 + $0x30] sm:$0xff]
        %v447 = vld [vmem:[%s431 + $0x38] sm:$0xff]
        %v448 = vld [vmem:[%s2] sm:$0xff]
        %v449 = vld [vmem:[%s2 + $0x8] sm:$0xff]
        %v450 = vld [vmem:[%s2 + $0x10] sm:$0xff]
        %v451 = vld [vmem:[%s2 + $0x18] sm:$0xff]
        %v452 = vld [vmem:[%s437] sm:$0xff]
        %v453 = vld [vmem:[%s437 + $0x8] sm:$0xff]
        %v454 = vld [vmem:[%s437 + $0x10] sm:$0xff]
        %v455 = vld [vmem:[%s437 + $0x18] sm:$0xff]
        %v456 = vld [vmem:[%s437 + $0x20] sm:$0xff]
        %v457 = vld [vmem:[%s437 + $0x28] sm:$0xff]
        %v458 = vld [vmem:[%s437 + $0x30] sm:$0xff]
        %v459 = vld [vmem:[%s437 + $0x38] sm:$0xff]
        %v460 = vld [vmem:[#allocation2] sm:$0xff]
        %v461 = vld [vmem:[#allocation2 + $0x8] sm:$0xff]
        %vm462 = vcmask 130048
        %v464 = vsel %vm462, %v452, 0
        %v467 = vsel %vm462, %v453, 0
        %v470 = vsel %vm462, %v454, 0
        %v473 = vsel %vm462, %v455, 0
        %v476 = vsel %vm462, %v456, 0
        %v479 = vsel %vm462, %v457, 0
        %v482 = vsel %vm462, %v458, 0
        %v485 = vsel %vm462, %v459, 0
        %487 = vmatprep.subr.mxu0 0.0
        %488 = vmatpush1.msra.mxu0 %v460
        %489 = vmatprep.subr.mxu0 0.0
        %490 = vmatpush1.msra.mxu0 %v461
        %491 = vmatprep.subr.mxu0 0.0
        %492 = vmatpush1.msra.mxu0 0.0
        %493 = vmatprep.subr.mxu0 0.0
        %494 = vmatpush1.msra.mxu0 0.0
        %495 = vmatprep.subr.mxu0 0.0
        %496 = vmatpush1.msra.mxu0 0.0
        %497 = vmatprep.subr.mxu0 0.0
        %498 = vmatpush1.msra.mxu0 0.0
        %499 = vmatprep.subr.mxu0 0.0
        %500 = vmatpush1.msra.mxu0 0.0
        %501 = vmatprep.subr.mxu0 0.0
        %502 = vmatpush1.msra.mxu0 0.0
        %503 = vmatprep.subr.mxu0 0.0
        %504 = vmatpush1.msra.mxu0 0.0
        %505 = vmatprep.subr.mxu0 0.0
        %506 = vmatpush1.msra.mxu0 0.0
        %507 = vmatprep.subr.mxu0 0.0
        %508 = vmatpush1.msra.mxu0 0.0
        %509 = vmatprep.subr.mxu0 0.0
        %510 = vmatpush1.msra.mxu0 0.0
        %511 = vmatprep.subr.mxu0 0.0
        %512 = vmatpush1.msra.mxu0 0.0
        %513 = vmatprep.subr.mxu0 0.0
        %514 = vmatpush1.msra.mxu0 0.0
        %515 = vmatprep.subr.mxu0 0.0
        %516 = vmatpush1.msra.mxu0 0.0
        %517 = vmatprep.subr.mxu0 0.0
        %518 = vmatpush1.msra.mxu0 0.0
        %519 = vmatprep.subr.mxu0 0.0
        %520 = vmatpush1.msra.mxu0 0.0
        %521 = vmatprep.subr.mxu0 0.0
        %522 = vmatpush1.msra.mxu0 0.0
        %523 = vmatprep.subr.mxu0 0.0
        %524 = vmatpush1.msra.mxu0 0.0
        %525 = vmatprep.subr.mxu0 0.0
        %526 = vmatpush1.msra.mxu0 0.0
        %527 = vmatprep.subr.mxu0 0.0
        %528 = vmatpush1.msra.mxu0 0.0
        %529 = vmatprep.subr.mxu0 0.0
        %530 = vmatpush1.msra.mxu0 0.0
        %531 = vmatprep.subr.mxu0 0.0
        %532 = vmatpush1.msra.mxu0 0.0
        %533 = vmatprep.subr.mxu0 0.0
        %534 = vmatpush1.msra.mxu0 0.0
        %535 = vmatprep.subr.mxu0 0.0
        %536 = vmatpush1.msra.mxu0 0.0
        %537 = vmatprep.subr.mxu0 0.0
        %538 = vmatpush1.msra.mxu0 0.0
        %539 = vmatprep.subr.mxu0 0.0
        %540 = vmatpush1.msra.mxu0 0.0
        %541 = vmatprep.subr.mxu0 0.0
        %542 = vmatpush1.msra.mxu0 0.0
        %543 = vmatprep.subr.mxu0 0.0
        %544 = vmatpush1.msra.mxu0 0.0
        %545 = vmatprep.subr.mxu0 0.0
        %546 = vmatpush1.msra.mxu0 0.0
        %547 = vmatprep.subr.mxu0 0.0
        %548 = vmatpush1.msra.mxu0 0.0
        %549 = vmatprep.subr.mxu0 0.0
        %550 = vmatpush1.msra.mxu0 0.0
        %551 = vmatprep.mubr.f32.mxu0 0.0
        %552 = vmatmul.mubr.f32.gmra.mrb[0].mxu0 %v464
        %v553 = vpop.f32.mrb[0].mxu0
        %v554 = vadd.f32 0.0, %v553
        %v555 = vpop.f32.mrb[0].mxu0
        %556 = vmatprep.mubr.f32.mxu0 0.0
        %557 = vmatmul.mubr.f32.gmra.mrb[0].mxu0 %v467
        %v558 = vpop.f32.mrb[0].mxu0
        %v559 = vadd.f32 0.0, %v558
        %v560 = vpop.f32.mrb[0].mxu0
        %561 = vmatprep.mubr.f32.mxu0 0.0
        %562 = vmatmul.mubr.f32.gmra.mrb[0].mxu0 %v470
        %v563 = vpop.f32.mrb[0].mxu0
        %v564 = vadd.f32 0.0, %v563
        %v565 = vpop.f32.mrb[0].mxu0
        %566 = vmatprep.mubr.f32.mxu0 0.0
        %567 = vmatmul.mubr.f32.gmra.mrb[0].mxu0 %v473
        %v568 = vpop.f32.mrb[0].mxu0
        %v569 = vadd.f32 0.0, %v568
        %v570 = vpop.f32.mrb[0].mxu0
        %571 = vmatprep.mubr.f32.mxu0 0.0
        %572 = vmatmul.mubr.f32.gmra.mrb[0].mxu0 %v476
        %v573 = vpop.f32.mrb[0].mxu0
        %v574 = vadd.f32 0.0, %v573
        %v575 = vpop.f32.mrb[0].mxu0
        %576 = vmatprep.mubr.f32.mxu0 0.0
        %577 = vmatmul.mubr.f32.gmra.mrb[0].mxu0 %v479
        %v578 = vpop.f32.mrb[0].mxu0
        %v579 = vadd.f32 0.0, %v578
        %v580 = vpop.f32.mrb[0].mxu0
        %581 = vmatprep.mubr.f32.mxu0 0.0
        %582 = vmatmul.mubr.f32.gmra.mrb[0].mxu0 %v482
        %v583 = vpop.f32.mrb[0].mxu0
        %v584 = vadd.f32 0.0, %v583
        %v585 = vpop.f32.mrb[0].mxu0
        %586 = vmatprep.mubr.f32.mxu0 0.0
        %587 = vmatmul.mubr.f32.gmra.mrb[0].mxu0 %v485
        %v588 = vpop.f32.mrb[0].mxu0
        %v589 = vadd.f32 0.0, %v588
        %v590 = vpop.f32.mrb[0].mxu0
        %591 = vdwg.mxu0
        %vm592 = vcmask 261120
        %v594 = vsel %vm592, %v440, 0
        %v597 = vsel %vm592, %v441, 0
        %v600 = vsel %vm592, %v442, 0
        %v603 = vsel %vm592, %v443, 0
        %v606 = vsel %vm592, %v444, 0
        %v609 = vsel %vm592, %v445, 0
        %v612 = vsel %vm592, %v446, 0
        %v615 = vsel %vm592, %v447, 0
        %617 = vmatprep.subr.mxu0 0.0
        %618 = vmatpush1.msra.mxu0 %v448
        %619 = vmatprep.subr.mxu0 0.0
        %620 = vmatpush1.msra.mxu0 %v449
        %621 = vmatprep.subr.mxu0 0.0
        %622 = vmatpush1.msra.mxu0 %v450
        %623 = vmatprep.subr.mxu0 0.0
        %624 = vmatpush1.msra.mxu0 %v451
        %625 = vmatprep.subr.mxu0 0.0
        %626 = vmatpush1.msra.mxu0 0.0
        %627 = vmatprep.subr.mxu0 0.0
        %628 = vmatpush1.msra.mxu0 0.0
        %629 = vmatprep.subr.mxu0 0.0
        %630 = vmatpush1.msra.mxu0 0.0
        %631 = vmatprep.subr.mxu0 0.0
        %632 = vmatpush1.msra.mxu0 0.0
        %633 = vmatprep.subr.mxu0 0.0
        %634 = vmatpush1.msra.mxu0 0.0
        %635 = vmatprep.subr.mxu0 0.0
        %636 = vmatpush1.msra.mxu0 0.0
        %637 = vmatprep.subr.mxu0 0.0
        %638 = vmatpush1.msra.mxu0 0.0
        %639 = vmatprep.subr.mxu0 0.0
        %640 = vmatpush1.msra.mxu0 0.0
        %641 = vmatprep.subr.mxu0 0.0
        %642 = vmatpush1.msra.mxu0 0.0
        %643 = vmatprep.subr.mxu0 0.0
        %644 = vmatpush1.msra.mxu0 0.0
        %645 = vmatprep.subr.mxu0 0.0
        %646 = vmatpush1.msra.mxu0 0.0
        %647 = vmatprep.subr.mxu0 0.0
        %648 = vmatpush1.msra.mxu0 0.0
        %649 = vmatprep.subr.mxu0 0.0
        %650 = vmatpush1.msra.mxu0 0.0
        %651 = vmatprep.subr.mxu0 0.0
        %652 = vmatpush1.msra.mxu0 0.0
        %653 = vmatprep.subr.mxu0 0.0
        %654 = vmatpush1.msra.mxu0 0.0
        %655 = vmatprep.subr.mxu0 0.0
        %656 = vmatpush1.msra.mxu0 0.0
        %657 = vmatprep.subr.mxu0 0.0
        %658 = vmatpush1.msra.mxu0 0.0
        %659 = vmatprep.subr.mxu0 0.0
        %660 = vmatpush1.msra.mxu0 0.0
        %661 = vmatprep.subr.mxu0 0.0
        %662 = vmatpush1.msra.mxu0 0.0
        %663 = vmatprep.subr.mxu0 0.0
        %664 = vmatpush1.msra.mxu0 0.0
        %665 = vmatprep.subr.mxu0 0.0
        %666 = vmatpush1.msra.mxu0 0.0
        %667 = vmatprep.subr.mxu0 0.0
        %668 = vmatpush1.msra.mxu0 0.0
        %669 = vmatprep.subr.mxu0 0.0
        %670 = vmatpush1.msra.mxu0 0.0
        %671 = vmatprep.subr.mxu0 0.0
        %672 = vmatpush1.msra.mxu0 0.0
        %673 = vmatprep.subr.mxu0 0.0
        %674 = vmatpush1.msra.mxu0 0.0
        %675 = vmatprep.subr.mxu0 0.0
        %676 = vmatpush1.msra.mxu0 0.0
        %677 = vmatprep.subr.mxu0 0.0
        %678 = vmatpush1.msra.mxu0 0.0
        %679 = vmatprep.subr.mxu0 0.0
        %680 = vmatpush1.msra.mxu0 0.0
        %681 = vmatprep.mubr.f32.mxu0 0.0
        %682 = vmatmul.mubr.f32.gmra.mrb[0].mxu0 %v594
        %v683 = vpop.f32.mrb[0].mxu0
        %v684 = vadd.f32 %v554, %v683
        %v685 = vpop.f32.mrb[0].mxu0
        %686 = vmatprep.mubr.f32.mxu0 0.0
        %687 = vmatmul.mubr.f32.gmra.mrb[0].mxu0 %v597
        %v688 = vpop.f32.mrb[0].mxu0
        %v689 = vadd.f32 %v559, %v688
        %v690 = vpop.f32.mrb[0].mxu0
        %691 = vmatprep.mubr.f32.mxu0 0.0
        %692 = vmatmul.mubr.f32.gmra.mrb[0].mxu0 %v600
        %v693 = vpop.f32.mrb[0].mxu0
        %v694 = vadd.f32 %v564, %v693
        %v695 = vpop.f32.mrb[0].mxu0
        %696 = vmatprep.mubr.f32.mxu0 0.0
        %697 = vmatmul.mubr.f32.gmra.mrb[0].mxu0 %v603
        %v698 = vpop.f32.mrb[0].mxu0
        %v699 = vadd.f32 %v569, %v698
        %v700 = vpop.f32.mrb[0].mxu0
        %701 = vmatprep.mubr.f32.mxu0 0.0
        %702 = vmatmul.mubr.f32.gmra.mrb[0].mxu0 %v606
        %v703 = vpop.f32.mrb[0].mxu0
        %v704 = vadd.f32 %v574, %v703
        %v705 = vpop.f32.mrb[0].mxu0
        %706 = vmatprep.mubr.f32.mxu0 0.0
        %707 = vmatmul.mubr.f32.gmra.mrb[0].mxu0 %v609
        %v708 = vpop.f32.mrb[0].mxu0
        %v709 = vadd.f32 %v579, %v708
        %v710 = vpop.f32.mrb[0].mxu0
        %711 = vmatprep.mubr.f32.mxu0 0.0
        %712 = vmatmul.mubr.f32.gmra.mrb[0].mxu0 %v612
        %v713 = vpop.f32.mrb[0].mxu0
        %v714 = vadd.f32 %v584, %v713
        %v715 = vpop.f32.mrb[0].mxu0
        %716 = vmatprep.mubr.f32.mxu0 0.0
        %717 = vmatmul.mubr.f32.gmra.mrb[0].mxu0 %v615
        %v718 = vpop.f32.mrb[0].mxu0
        %v719 = vadd.f32 %v589, %v718
        %v720 = vpop.f32.mrb[0].mxu0
        %721 = vdwg.mxu0
        %v722 = vld [vmem:[%s4] sm:$0x1]
        %v724 = vlaneseq
        %v725 = vshrl.u32 %v724, 7
        %v726 = vsub.s32 0, %v725
        %v727 = vrot.slane %v722, %v726
        %v729 = vadd.f32 %v684, %v727
        %v730 = vadd.f32 %v689, %v727
        %v731 = vadd.f32 %v694, %v727
        %v732 = vadd.f32 %v699, %v727
        %v733 = vadd.f32 %v704, %v727
        %v734 = vadd.f32 %v709, %v727
        %v735 = vadd.f32 %v714, %v727
        %v736 = vadd.f32 %v719, %v727
        %vm737 = vcmp.ge.f32.partialorder %v729, 0.0
        %vm738 = vcmp.ge.f32.partialorder %v730, 0.0
        %vm739 = vcmp.ge.f32.partialorder %v731, 0.0
        %vm740 = vcmp.ge.f32.partialorder %v732, 0.0
        %vm741 = vcmp.ge.f32.partialorder %v733, 0.0
        %vm742 = vcmp.ge.f32.partialorder %v734, 0.0
        %vm743 = vcmp.ge.f32.partialorder %v735, 0.0
        %vm744 = vcmp.ge.f32.partialorder %v736, 0.0
        %v745 = vmul.f32 %v729, 0.2
        %v746 = vmul.f32 %v730, 0.2
        %v747 = vmul.f32 %v731, 0.2
        %v748 = vmul.f32 %v732, 0.2
        %v749 = vmul.f32 %v733, 0.2
        %v750 = vmul.f32 %v734, 0.2
        %v751 = vmul.f32 %v735, 0.2
        %v752 = vmul.f32 %v736, 0.2
        %v753 = vsel %vm737, %v729, %v745
        %v754 = vsel %vm738, %v730, %v746
        %v755 = vsel %vm739, %v731, %v747
        %v756 = vsel %vm740, %v732, %v748
        %v757 = vsel %vm741, %v733, %v749
        %v758 = vsel %vm742, %v734, %v750
        %v759 = vsel %vm743, %v735, %v751
        %v760 = vsel %vm744, %v736, %v752
        %v761 = vld [vmem:[%s5] sm:$0xff]
        %v762 = vld [vmem:[%s5 + $0x8] sm:$0xff]
        %v763 = vld [vmem:[%s5 + $0x10] sm:$0xff]
        %v764 = vld [vmem:[%s5 + $0x18] sm:$0xff]
        %v765 = vld [vmem:[%s5 + $0x20] sm:$0xff]
        %v766 = vld [vmem:[%s5 + $0x28] sm:$0xff]
        %v767 = vld [vmem:[%s5 + $0x30] sm:$0xff]
        %v768 = vld [vmem:[%s5 + $0x38] sm:$0xff]
        %v769 = vld [vmem:[%s5 + $0x40] sm:$0xff]
        %v770 = vld [vmem:[%s5 + $0x48] sm:$0xff]
        %v771 = vld [vmem:[%s5 + $0x50] sm:$0xff]
        %v772 = vld [vmem:[%s5 + $0x58] sm:$0xff]
        %v773 = vld [vmem:[%s5 + $0x60] sm:$0xff]
        %v774 = vld [vmem:[%s5 + $0x68] sm:$0xff]
        %v775 = vld [vmem:[%s5 + $0x70] sm:$0xff]
        %v776 = vld [vmem:[%s5 + $0x78] sm:$0xff]
        %v777 = vld [vmem:[%s6] sm:$0x1]
        %v779 = vlaneseq
        %v780 = vshrl.u32 %v779, 7
        %v781 = vsub.s32 0, %v780
        %v782 = vrot.slane %v777, %v781
        %784 = vmatprep.subr.mxu0 0.0
        %785 = vmatpush1.msra.mxu0 %v761
        %786 = vmatprep.subr.mxu0 0.0
        %787 = vmatpush1.msra.mxu0 %v762
        %788 = vmatprep.subr.mxu0 0.0
        %789 = vmatpush1.msra.mxu0 %v763
        %790 = vmatprep.subr.mxu0 0.0
        %791 = vmatpush1.msra.mxu0 %v764
        %792 = vmatprep.subr.mxu0 0.0
        %793 = vmatpush1.msra.mxu0 %v765
        %794 = vmatprep.subr.mxu0 0.0
        %795 = vmatpush1.msra.mxu0 %v766
        %796 = vmatprep.subr.mxu0 0.0
        %797 = vmatpush1.msra.mxu0 %v767
        %798 = vmatprep.subr.mxu0 0.0
        %799 = vmatpush1.msra.mxu0 %v768
        %800 = vmatprep.subr.mxu0 0.0
        %801 = vmatpush1.msra.mxu0 %v769
        %802 = vmatprep.subr.mxu0 0.0
        %803 = vmatpush1.msra.mxu0 %v770
        %804 = vmatprep.subr.mxu0 0.0
        %805 = vmatpush1.msra.mxu0 %v771
        %806 = vmatprep.subr.mxu0 0.0
        %807 = vmatpush1.msra.mxu0 %v772
        %808 = vmatprep.subr.mxu0 0.0
        %809 = vmatpush1.msra.mxu0 %v773
        %810 = vmatprep.subr.mxu0 0.0
        %811 = vmatpush1.msra.mxu0 %v774
        %812 = vmatprep.subr.mxu0 0.0
        %813 = vmatpush1.msra.mxu0 %v775
        %814 = vmatprep.subr.mxu0 0.0
        %815 = vmatpush1.msra.mxu0 %v776
        %816 = vmatprep.subr.mxu0 0.0
        %817 = vmatpush1.msra.mxu0 0.0
        %818 = vmatprep.subr.mxu0 0.0
        %819 = vmatpush1.msra.mxu0 0.0
        %820 = vmatprep.subr.mxu0 0.0
        %821 = vmatpush1.msra.mxu0 0.0
        %822 = vmatprep.subr.mxu0 0.0
        %823 = vmatpush1.msra.mxu0 0.0
        %824 = vmatprep.subr.mxu0 0.0
        %825 = vmatpush1.msra.mxu0 0.0
        %826 = vmatprep.subr.mxu0 0.0
        %827 = vmatpush1.msra.mxu0 0.0
        %828 = vmatprep.subr.mxu0 0.0
        %829 = vmatpush1.msra.mxu0 0.0
        %830 = vmatprep.subr.mxu0 0.0
        %831 = vmatpush1.msra.mxu0 0.0
        %832 = vmatprep.subr.mxu0 0.0
        %833 = vmatpush1.msra.mxu0 0.0
        %834 = vmatprep.subr.mxu0 0.0
        %835 = vmatpush1.msra.mxu0 0.0
        %836 = vmatprep.subr.mxu0 0.0
        %837 = vmatpush1.msra.mxu0 0.0
        %838 = vmatprep.subr.mxu0 0.0
        %839 = vmatpush1.msra.mxu0 0.0
        %840 = vmatprep.subr.mxu0 0.0
        %841 = vmatpush1.msra.mxu0 0.0
        %842 = vmatprep.subr.mxu0 0.0
        %843 = vmatpush1.msra.mxu0 0.0
        %844 = vmatprep.subr.mxu0 0.0
        %845 = vmatpush1.msra.mxu0 0.0
        %846 = vmatprep.subr.mxu0 0.0
        %847 = vmatpush1.msra.mxu0 0.0
        %848 = vmatprep.mubr.f32.mxu0 0.0
        %849 = vmatmul.mubr.f32.gmra.mrb[0].mxu0 %v753
        %v850 = vpop.f32.mrb[0].mxu0
        %v851 = vadd.f32 %v782, %v850
        %v852 = vpop.f32.mrb[0].mxu0
        %853 = vmatprep.mubr.f32.mxu0 0.0
        %854 = vmatmul.mubr.f32.gmra.mrb[0].mxu0 %v754
        %v855 = vpop.f32.mrb[0].mxu0
        %v856 = vadd.f32 %v782, %v855
        %v857 = vpop.f32.mrb[0].mxu0
        %858 = vmatprep.mubr.f32.mxu0 0.0
        %859 = vmatmul.mubr.f32.gmra.mrb[0].mxu0 %v755
        %v860 = vpop.f32.mrb[0].mxu0
        %v861 = vadd.f32 %v782, %v860
        %v862 = vpop.f32.mrb[0].mxu0
        %863 = vmatprep.mubr.f32.mxu0 0.0
        %864 = vmatmul.mubr.f32.gmra.mrb[0].mxu0 %v756
        %v865 = vpop.f32.mrb[0].mxu0
        %v866 = vadd.f32 %v782, %v865
        %v867 = vpop.f32.mrb[0].mxu0
        %868 = vmatprep.mubr.f32.mxu0 0.0
        %869 = vmatmul.mubr.f32.gmra.mrb[0].mxu0 %v757
        %v870 = vpop.f32.mrb[0].mxu0
        %v871 = vadd.f32 %v782, %v870
        %v872 = vpop.f32.mrb[0].mxu0
        %873 = vmatprep.mubr.f32.mxu0 0.0
        %874 = vmatmul.mubr.f32.gmra.mrb[0].mxu0 %v758
        %v875 = vpop.f32.mrb[0].mxu0
        %v876 = vadd.f32 %v782, %v875
        %v877 = vpop.f32.mrb[0].mxu0
        %878 = vmatprep.mubr.f32.mxu0 0.0
        %879 = vmatmul.mubr.f32.gmra.mrb[0].mxu0 %v759
        %v880 = vpop.f32.mrb[0].mxu0
        %v881 = vadd.f32 %v782, %v880
        %v882 = vpop.f32.mrb[0].mxu0
        %883 = vmatprep.mubr.f32.mxu0 0.0
        %884 = vmatmul.mubr.f32.gmra.mrb[0].mxu0 %v760
        %v885 = vpop.f32.mrb[0].mxu0
        %v886 = vadd.f32 %v782, %v885
        %v887 = vpop.f32.mrb[0].mxu0
        %888 = vdwg.mxu0
        %vm889 = vcmp.ge.f32.partialorder %v851, 0.0
        %vm890 = vcmp.ge.f32.partialorder %v856, 0.0
        %vm891 = vcmp.ge.f32.partialorder %v861, 0.0
        %vm892 = vcmp.ge.f32.partialorder %v866, 0.0
        %vm893 = vcmp.ge.f32.partialorder %v871, 0.0
        %vm894 = vcmp.ge.f32.partialorder %v876, 0.0
        %vm895 = vcmp.ge.f32.partialorder %v881, 0.0
        %vm896 = vcmp.ge.f32.partialorder %v886, 0.0
        %v897 = vmul.f32 %v851, 0.2
        %v898 = vmul.f32 %v856, 0.2
        %v899 = vmul.f32 %v861, 0.2
        %v900 = vmul.f32 %v866, 0.2
        %v901 = vmul.f32 %v871, 0.2
        %v902 = vmul.f32 %v876, 0.2
        %v903 = vmul.f32 %v881, 0.2
        %v904 = vmul.f32 %v886, 0.2
        %v905 = vsel %vm889, %v851, %v897
        %v906 = vsel %vm890, %v856, %v898
        %v907 = vsel %vm891, %v861, %v899
        %v908 = vsel %vm892, %v866, %v900
        %v909 = vsel %vm893, %v871, %v901
        %v910 = vsel %vm894, %v876, %v902
        %v911 = vsel %vm895, %v881, %v903
        %v912 = vsel %vm896, %v886, %v904
        %v913 = vld [vmem:[%s7] sm:$0xff]
        %v914 = vld [vmem:[%s7 + $0x8] sm:$0xff]
        %v915 = vld [vmem:[%s7 + $0x10] sm:$0xff]
        %v916 = vld [vmem:[%s7 + $0x18] sm:$0xff]
        %v917 = vld [vmem:[%s7 + $0x20] sm:$0xff]
        %v918 = vld [vmem:[%s7 + $0x28] sm:$0xff]
        %v919 = vld [vmem:[%s7 + $0x30] sm:$0xff]
        %v920 = vld [vmem:[%s7 + $0x38] sm:$0xff]
        %v921 = vld [vmem:[%s7 + $0x40] sm:$0xff]
        %v922 = vld [vmem:[%s7 + $0x48] sm:$0xff]
        %v923 = vld [vmem:[%s7 + $0x50] sm:$0xff]
        %v924 = vld [vmem:[%s7 + $0x58] sm:$0xff]
        %v925 = vld [vmem:[%s7 + $0x60] sm:$0xff]
        %v926 = vld [vmem:[%s7 + $0x68] sm:$0xff]
        %v927 = vld [vmem:[%s7 + $0x70] sm:$0xff]
        %v928 = vld [vmem:[%s7 + $0x78] sm:$0xff]
        %v929 = vld [vmem:[%s8] sm:$0x1]
        %v931 = vlaneseq
        %v932 = vshrl.u32 %v931, 7
        %v933 = vsub.s32 0, %v932
        %v934 = vrot.slane %v929, %v933
        %936 = vmatprep.subr.mxu0 0.0
        %937 = vmatpush1.msra.mxu0 %v913
        %938 = vmatprep.subr.mxu0 0.0
        %939 = vmatpush1.msra.mxu0 %v914
        %940 = vmatprep.subr.mxu0 0.0
        %941 = vmatpush1.msra.mxu0 %v915
        %942 = vmatprep.subr.mxu0 0.0
        %943 = vmatpush1.msra.mxu0 %v916
        %944 = vmatprep.subr.mxu0 0.0
        %945 = vmatpush1.msra.mxu0 %v917
        %946 = vmatprep.subr.mxu0 0.0
        %947 = vmatpush1.msra.mxu0 %v918
        %948 = vmatprep.subr.mxu0 0.0
        %949 = vmatpush1.msra.mxu0 %v919
        %950 = vmatprep.subr.mxu0 0.0
        %951 = vmatpush1.msra.mxu0 %v920
        %952 = vmatprep.subr.mxu0 0.0
        %953 = vmatpush1.msra.mxu0 %v921
        %954 = vmatprep.subr.mxu0 0.0
        %955 = vmatpush1.msra.mxu0 %v922
        %956 = vmatprep.subr.mxu0 0.0
        %957 = vmatpush1.msra.mxu0 %v923
        %958 = vmatprep.subr.mxu0 0.0
        %959 = vmatpush1.msra.mxu0 %v924
        %960 = vmatprep.subr.mxu0 0.0
        %961 = vmatpush1.msra.mxu0 %v925
        %962 = vmatprep.subr.mxu0 0.0
        %963 = vmatpush1.msra.mxu0 %v926
        %964 = vmatprep.subr.mxu0 0.0
        %965 = vmatpush1.msra.mxu0 %v927
        %966 = vmatprep.subr.mxu0 0.0
        %967 = vmatpush1.msra.mxu0 %v928
        %968 = vmatprep.subr.mxu0 0.0
        %969 = vmatpush1.msra.mxu0 0.0
        %970 = vmatprep.subr.mxu0 0.0
        %971 = vmatpush1.msra.mxu0 0.0
        %972 = vmatprep.subr.mxu0 0.0
        %973 = vmatpush1.msra.mxu0 0.0
        %974 = vmatprep.subr.mxu0 0.0
        %975 = vmatpush1.msra.mxu0 0.0
        %976 = vmatprep.subr.mxu0 0.0
        %977 = vmatpush1.msra.mxu0 0.0
        %978 = vmatprep.subr.mxu0 0.0
        %979 = vmatpush1.msra.mxu0 0.0
        %980 = vmatprep.subr.mxu0 0.0
        %981 = vmatpush1.msra.mxu0 0.0
        %982 = vmatprep.subr.mxu0 0.0
        %983 = vmatpush1.msra.mxu0 0.0
        %984 = vmatprep.subr.mxu0 0.0
        %985 = vmatpush1.msra.mxu0 0.0
        %986 = vmatprep.subr.mxu0 0.0
        %987 = vmatpush1.msra.mxu0 0.0
        %988 = vmatprep.subr.mxu0 0.0
        %989 = vmatpush1.msra.mxu0 0.0
        %990 = vmatprep.subr.mxu0 0.0
        %991 = vmatpush1.msra.mxu0 0.0
        %992 = vmatprep.subr.mxu0 0.0
        %993 = vmatpush1.msra.mxu0 0.0
        %994 = vmatprep.subr.mxu0 0.0
        %995 = vmatpush1.msra.mxu0 0.0
        %996 = vmatprep.subr.mxu0 0.0
        %997 = vmatpush1.msra.mxu0 0.0
        %998 = vmatprep.subr.mxu0 0.0
        %999 = vmatpush1.msra.mxu0 0.0
        %1000 = vmatprep.mubr.f32.mxu0 0.0
        %1001 = vmatmul.mubr.f32.gmra.mrb[0].mxu0 %v905
        %v1002 = vpop.f32.mrb[0].mxu0
        %v1003 = vadd.f32 %v934, %v1002
        %v1004 = vpop.f32.mrb[0].mxu0
        %1005 = vmatprep.mubr.f32.mxu0 0.0
        %1006 = vmatmul.mubr.f32.gmra.mrb[0].mxu0 %v906
        %v1007 = vpop.f32.mrb[0].mxu0
        %v1008 = vadd.f32 %v934, %v1007
        %v1009 = vpop.f32.mrb[0].mxu0
        %1010 = vmatprep.mubr.f32.mxu0 0.0
        %1011 = vmatmul.mubr.f32.gmra.mrb[0].mxu0 %v907
        %v1012 = vpop.f32.mrb[0].mxu0
        %v1013 = vadd.f32 %v934, %v1012
        %v1014 = vpop.f32.mrb[0].mxu0
        %1015 = vmatprep.mubr.f32.mxu0 0.0
        %1016 = vmatmul.mubr.f32.gmra.mrb[0].mxu0 %v908
        %v1017 = vpop.f32.mrb[0].mxu0
        %v1018 = vadd.f32 %v934, %v1017
        %v1019 = vpop.f32.mrb[0].mxu0
        %1020 = vmatprep.mubr.f32.mxu0 0.0
        %1021 = vmatmul.mubr.f32.gmra.mrb[0].mxu0 %v909
        %v1022 = vpop.f32.mrb[0].mxu0
        %v1023 = vadd.f32 %v934, %v1022
        %v1024 = vpop.f32.mrb[0].mxu0
        %1025 = vmatprep.mubr.f32.mxu0 0.0
        %1026 = vmatmul.mubr.f32.gmra.mrb[0].mxu0 %v910
        %v1027 = vpop.f32.mrb[0].mxu0
        %v1028 = vadd.f32 %v934, %v1027
        %v1029 = vpop.f32.mrb[0].mxu0
        %1030 = vmatprep.mubr.f32.mxu0 0.0
        %1031 = vmatmul.mubr.f32.gmra.mrb[0].mxu0 %v911
        %v1032 = vpop.f32.mrb[0].mxu0
        %v1033 = vadd.f32 %v934, %v1032
        %v1034 = vpop.f32.mrb[0].mxu0
        %1035 = vmatprep.mubr.f32.mxu0 0.0
        %1036 = vmatmul.mubr.f32.gmra.mrb[0].mxu0 %v912
        %v1037 = vpop.f32.mrb[0].mxu0
        %v1038 = vadd.f32 %v934, %v1037
        %v1039 = vpop.f32.mrb[0].mxu0
        %1040 = vdwg.mxu0
        %vm1041 = vcmp.ge.f32.partialorder %v1003, 0.0
        %vm1042 = vcmp.ge.f32.partialorder %v1008, 0.0
        %vm1043 = vcmp.ge.f32.partialorder %v1013, 0.0
        %vm1044 = vcmp.ge.f32.partialorder %v1018, 0.0
        %vm1045 = vcmp.ge.f32.partialorder %v1023, 0.0
        %vm1046 = vcmp.ge.f32.partialorder %v1028, 0.0
        %vm1047 = vcmp.ge.f32.partialorder %v1033, 0.0
        %vm1048 = vcmp.ge.f32.partialorder %v1038, 0.0
        %v1049 = vmul.f32 %v1003, 0.2
        %v1050 = vmul.f32 %v1008, 0.2
        %v1051 = vmul.f32 %v1013, 0.2
        %v1052 = vmul.f32 %v1018, 0.2
        %v1053 = vmul.f32 %v1023, 0.2
        %v1054 = vmul.f32 %v1028, 0.2
        %v1055 = vmul.f32 %v1033, 0.2
        %v1056 = vmul.f32 %v1038, 0.2
        %v1057 = vsel %vm1041, %v1003, %v1049
        %v1058 = vsel %vm1042, %v1008, %v1050
        %v1059 = vsel %vm1043, %v1013, %v1051
        %v1060 = vsel %vm1044, %v1018, %v1052
        %v1061 = vsel %vm1045, %v1023, %v1053
        %v1062 = vsel %vm1046, %v1028, %v1054
        %v1063 = vsel %vm1047, %v1033, %v1055
        %v1064 = vsel %vm1048, %v1038, %v1056
        %v1065 = vld [vmem:[#allocation5] sm:$0xff]
        %v1066 = vld [vmem:[#allocation5 + $0x8] sm:$0xff]
        %v1067 = vld [vmem:[#allocation5 + $0x10] sm:$0xff]
        %v1068 = vld [vmem:[#allocation5 + $0x18] sm:$0xff]
        %v1069 = vld [vmem:[#allocation5 + $0x20] sm:$0xff]
        %v1070 = vld [vmem:[#allocation5 + $0x28] sm:$0xff]
        %v1071 = vld [vmem:[#allocation5 + $0x30] sm:$0xff]
        %v1072 = vld [vmem:[#allocation5 + $0x38] sm:$0xff]
        %v1073 = vld [vmem:[#allocation5 + $0x40] sm:$0xff]
        %v1074 = vld [vmem:[#allocation5 + $0x48] sm:$0xff]
        %v1075 = vld [vmem:[#allocation5 + $0x50] sm:$0xff]
        %v1076 = vld [vmem:[#allocation5 + $0x58] sm:$0xff]
        %v1077 = vld [vmem:[#allocation5 + $0x60] sm:$0xff]
        %v1078 = vld [vmem:[#allocation5 + $0x68] sm:$0xff]
        %v1079 = vld [vmem:[#allocation5 + $0x70] sm:$0xff]
        %v1080 = vld [vmem:[#allocation5 + $0x78] sm:$0xff]
        %v1081 = vld [vmem:[%s10] sm:$0x1]
        %v1083 = vlaneseq
        %v1084 = vshrl.u32 %v1083, 7
        %v1085 = vsub.s32 0, %v1084
        %v1086 = vrot.slane %v1081, %v1085
        %1088 = vmatprep.subr.mxu0 0.0
        %1089 = vmatpush1.msra.mxu0 %v1065
        %1090 = vmatprep.subr.mxu0 0.0
        %1091 = vmatpush1.msra.mxu0 %v1066
        %1092 = vmatprep.subr.mxu0 0.0
        %1093 = vmatpush1.msra.mxu0 %v1067
        %1094 = vmatprep.subr.mxu0 0.0
        %1095 = vmatpush1.msra.mxu0 %v1068
        %1096 = vmatprep.subr.mxu0 0.0
        %1097 = vmatpush1.msra.mxu0 %v1069
        %1098 = vmatprep.subr.mxu0 0.0
        %1099 = vmatpush1.msra.mxu0 %v1070
        %1100 = vmatprep.subr.mxu0 0.0
        %1101 = vmatpush1.msra.mxu0 %v1071
        %1102 = vmatprep.subr.mxu0 0.0
        %1103 = vmatpush1.msra.mxu0 %v1072
        %1104 = vmatprep.subr.mxu0 0.0
        %1105 = vmatpush1.msra.mxu0 %v1073
        %1106 = vmatprep.subr.mxu0 0.0
        %1107 = vmatpush1.msra.mxu0 %v1074
        %1108 = vmatprep.subr.mxu0 0.0
        %1109 = vmatpush1.msra.mxu0 %v1075
        %1110 = vmatprep.subr.mxu0 0.0
        %1111 = vmatpush1.msra.mxu0 %v1076
        %1112 = vmatprep.subr.mxu0 0.0
        %1113 = vmatpush1.msra.mxu0 %v1077
        %1114 = vmatprep.subr.mxu0 0.0
        %1115 = vmatpush1.msra.mxu0 %v1078
        %1116 = vmatprep.subr.mxu0 0.0
        %1117 = vmatpush1.msra.mxu0 %v1079
        %1118 = vmatprep.subr.mxu0 0.0
        %1119 = vmatpush1.msra.mxu0 %v1080
        %1120 = vmatprep.subr.mxu0 0.0
        %1121 = vmatpush1.msra.mxu0 0.0
        %1122 = vmatprep.subr.mxu0 0.0
        %1123 = vmatpush1.msra.mxu0 0.0
        %1124 = vmatprep.subr.mxu0 0.0
        %1125 = vmatpush1.msra.mxu0 0.0
        %1126 = vmatprep.subr.mxu0 0.0
        %1127 = vmatpush1.msra.mxu0 0.0
        %1128 = vmatprep.subr.mxu0 0.0
        %1129 = vmatpush1.msra.mxu0 0.0
        %1130 = vmatprep.subr.mxu0 0.0
        %1131 = vmatpush1.msra.mxu0 0.0
        %1132 = vmatprep.subr.mxu0 0.0
        %1133 = vmatpush1.msra.mxu0 0.0
        %1134 = vmatprep.subr.mxu0 0.0
        %1135 = vmatpush1.msra.mxu0 0.0
        %1136 = vmatprep.subr.mxu0 0.0
        %1137 = vmatpush1.msra.mxu0 0.0
        %1138 = vmatprep.subr.mxu0 0.0
        %1139 = vmatpush1.msra.mxu0 0.0
        %1140 = vmatprep.subr.mxu0 0.0
        %1141 = vmatpush1.msra.mxu0 0.0
        %1142 = vmatprep.subr.mxu0 0.0
        %1143 = vmatpush1.msra.mxu0 0.0
        %1144 = vmatprep.subr.mxu0 0.0
        %1145 = vmatpush1.msra.mxu0 0.0
        %1146 = vmatprep.subr.mxu0 0.0
        %1147 = vmatpush1.msra.mxu0 0.0
        %1148 = vmatprep.subr.mxu0 0.0
        %1149 = vmatpush1.msra.mxu0 0.0
        %1150 = vmatprep.subr.mxu0 0.0
        %1151 = vmatpush1.msra.mxu0 0.0
        %1152 = vmatprep.mubr.f32.mxu0 0.0
        %1153 = vmatmul.mubr.f32.gmra.mrb[0].mxu0 %v1057
        %v1154 = vpop.f32.mrb[0].mxu0
        %v1155 = vadd.f32 %v1086, %v1154
        %v1156 = vpop.f32.mrb[0].mxu0
        %1157 = vmatprep.mubr.f32.mxu0 0.0
        %1158 = vmatmul.mubr.f32.gmra.mrb[0].mxu0 %v1058
        %v1159 = vpop.f32.mrb[0].mxu0
        %v1160 = vadd.f32 %v1086, %v1159
        %v1161 = vpop.f32.mrb[0].mxu0
        %1162 = vmatprep.mubr.f32.mxu0 0.0
        %1163 = vmatmul.mubr.f32.gmra.mrb[0].mxu0 %v1059
        %v1164 = vpop.f32.mrb[0].mxu0
        %v1165 = vadd.f32 %v1086, %v1164
        %v1166 = vpop.f32.mrb[0].mxu0
        %1167 = vmatprep.mubr.f32.mxu0 0.0
        %1168 = vmatmul.mubr.f32.gmra.mrb[0].mxu0 %v1060
        %v1169 = vpop.f32.mrb[0].mxu0
        %v1170 = vadd.f32 %v1086, %v1169
        %v1171 = vpop.f32.mrb[0].mxu0
        %1172 = vmatprep.mubr.f32.mxu0 0.0
        %1173 = vmatmul.mubr.f32.gmra.mrb[0].mxu0 %v1061
        %v1174 = vpop.f32.mrb[0].mxu0
        %v1175 = vadd.f32 %v1086, %v1174
        %v1176 = vpop.f32.mrb[0].mxu0
        %1177 = vmatprep.mubr.f32.mxu0 0.0
        %1178 = vmatmul.mubr.f32.gmra.mrb[0].mxu0 %v1062
        %v1179 = vpop.f32.mrb[0].mxu0
        %v1180 = vadd.f32 %v1086, %v1179
        %v1181 = vpop.f32.mrb[0].mxu0
        %1182 = vmatprep.mubr.f32.mxu0 0.0
        %1183 = vmatmul.mubr.f32.gmra.mrb[0].mxu0 %v1063
        %v1184 = vpop.f32.mrb[0].mxu0
        %v1185 = vadd.f32 %v1086, %v1184
        %v1186 = vpop.f32.mrb[0].mxu0
        %1187 = vmatprep.mubr.f32.mxu0 0.0
        %1188 = vmatmul.mubr.f32.gmra.mrb[0].mxu0 %v1064
        %v1189 = vpop.f32.mrb[0].mxu0
        %v1190 = vadd.f32 %v1086, %v1189
        %v1191 = vpop.f32.mrb[0].mxu0
        %1192 = vdwg.mxu0
        %1193 = vst [vmem:[%s426] sm:$0xff] %v1155
        %1194 = vst [vmem:[%s426 + $0x8] sm:$0xff] %v1160
        %1195 = vst [vmem:[%s426 + $0x10] sm:$0xff] %v1165
        %1196 = vst [vmem:[%s426 + $0x18] sm:$0xff] %v1170
        %1197 = vst [vmem:[%s426 + $0x20] sm:$0xff] %v1175
        %1198 = vst [vmem:[%s426 + $0x28] sm:$0xff] %v1180
        %1199 = vst [vmem:[%s426 + $0x30] sm:$0xff] %v1185
        %1200 = vst [vmem:[%s426 + $0x38] sm:$0xff] %v1190
        %s1201 = sand.u32 %s276, 1
        %s1202 = scalar_lea.sflag [#allocation4], %s1201
        %s1203 = sand.u32 %s276, 1
        %s1204 = smul.addr %s1203, 64
        %s1205 = scalar_lea.vmem [#allocation7], %s1204
        // Predicated region
        $region73: #{tpu_custom_call.1} parent=63 // pred_check
          %p1206 = pneg %p286
        $region74: #{tpu_custom_call.1} parent=63 // pred_check_branch
          %1208 = sbr.rel (%p1206) target = $region76
        $region75: #{tpu_custom_call.1} parent=63 // pred_region
          %s1209 = smul.u32 8, %s27
          %s1211 = ssub.s32 1024, 1024
          %1212 = vsyncadd %s1202, %s1211
          %s1213 = smul.addr %s1209, 128
          %s1214 = scalar_lea.hbm %s11, %s1213
          %s1215 = sshll.u32 %s1205, 4
          %s1216 = int_to_ptr.vmem [resolvable:$true] %s1215
          %1221 = dma.vmem_to_hbm [thread:$0]  %s1216, 1024, %s1214, %s1202, 128, 128, 8
        $region76: #{tpu_custom_call.1} parent=63 // pred_fallthru
          _
      $region64: #{tpu_custom_call.1} parent=5 // pred_fallthru
        _
      %p1222 = scmp.le.s32.totalorder 2, %s22
      // Predicated region
      $region77: #{tpu_custom_call.1} parent=5 // pred_check
        %p1223 = pneg %p1222
      $region78: #{tpu_custom_call.1} parent=5 // pred_check_branch
        %1225 = sbr.rel (%p1223) target = $region80
      $region79: #{tpu_custom_call.1} parent=5 // pred_region
        %s1226 = ssub.s32 %s22, 2
        // Predicated region
        $region81: #{tpu_custom_call.1} parent=79 // pred_check
          %p1227 = pneg %p292
        $region82: #{tpu_custom_call.1} parent=79 // pred_check_branch
          %1229 = sbr.rel (%p1227) target = $region84
        $region83: #{tpu_custom_call.1} parent=79 // pred_region
          %s1230 = sand.u32 %s277, 1
          %s1231 = scalar_lea.sflag [#allocation4], %s1230
          %s1232 = sand.u32 %s277, 1
          %s1233 = smul.addr %s1232, 64
          %s1234 = scalar_lea.vmem [#allocation7], %s1233
          %1235 = dma.done %s1231, 1024
        $region84: #{tpu_custom_call.1} parent=79 // pred_fallthru
          _
      $region80: #{tpu_custom_call.1} parent=5 // pred_fallthru
        _
    $region6: #{tpu_custom_call.1} parent=1 // loop_footer
      %s26 = sadd.s32 1, %s22
    $region7: #{tpu_custom_call.1} parent=1 // loop_footer_branch
      %21 = sbr.rel target = $region3
    $region8: #{tpu_custom_call.1} parent=1 // loop_exit
      _
    %1236 = vsyncpa [#allocation3], 1
    %s1237 = scalar_lea.sflag [#allocation3], 1
    %1238 = vsyncpa %s1237, 1
    %1239 = vsyncpa [#allocation6], 1
    %1240 = vsyncpa [#allocation4], 1
    %s1241 = scalar_lea.sflag [#allocation4], 1
    %1242 = vsyncpa %s1241, 1

</llo_original>
